<compile_context>
chip_gen: v6e
topology: v6e:2x2x1
jax: 0.10.0
libtpu: 0.0.40
codegen_flags: <defaults>
</compile_context>

<pallas_src>
import jax
import jax.numpy as jnp
from jax.experimental import pallas as pl
from jax.experimental.pallas import tpu as pltpu

IN_DIM = 28 * 28
H1, H2, OUT = 128, 64, 10
OUT_PAD = 128  # lane-dense padded logits (slice [:, :10] in the wrapper)


def _round_up(n, m):
    return ((n + m - 1) // m) * m


def mlp_kernel(x_ref, w1_ref, b1_ref, w2_ref, b2_ref, w3_ref, b3_ref, o_ref):
    # Fused fc1 -> ReLU -> fc2 -> ReLU -> fc3 on one (TB, 784) batch tile.
    # f32 x streamed from HBM, bf16 cast on the VPU (hidden under DMA),
    # bf16 operands into the MXU, f32 accumulation / bias-add / ReLU,
    # bf16 lane-dense (TB, 128) store.
    x = x_ref[...].astype(jnp.bfloat16)                               # (TB, 784)
    h1 = jnp.dot(x, w1_ref[...], preferred_element_type=jnp.float32) + b1_ref[...]
    h1 = jnp.maximum(h1, 0.0).astype(jnp.bfloat16)                    # (TB, 128)
    h2 = jnp.dot(h1, w2_ref[...], preferred_element_type=jnp.float32) + b2_ref[...]
    h2 = jnp.maximum(h2, 0.0).astype(jnp.bfloat16)                    # (TB, 64)
    h3 = jnp.dot(h2, w3_ref[...], preferred_element_type=jnp.float32) + b3_ref[...]
    o_ref[...] = h3.astype(o_ref.dtype)                               # (TB, 128) bf16


def prepare_params(params):
    """One-time weight prep (cast/pad), cached with the params — not per call."""
    w1, b1, w2, b2, w3, b3 = params
    w1b = w1.astype(jnp.bfloat16)
    w2b = w2.astype(jnp.bfloat16)
    w3p = jnp.pad(w3, ((0, 0), (0, OUT_PAD - OUT))).astype(jnp.bfloat16)
    b3p = jnp.pad(b3, ((0, 0), (0, OUT_PAD - OUT)))            # biases stay f32
    return (w1b, b1, w2b, b2, w3p, b3p)


def net_forward(x, prepped_params, *, batch_tile=2048):
    """x: (B, 28, 28) or (B, 784) float32 -> logits (B, 10) bfloat16."""
    w1b, b1, w2b, b2, w3p, b3p = prepped_params
    B = x.shape[0]
    x2d = x.reshape(B, IN_DIM)  # metadata-only reshape; x stays f32 (cast is in-kernel)

    # Batch tile: multiple of 16 (bf16 sublane packing on the output path).
    # Clamp to ~ceil(B/2) so the grid has >=2 steps for v7x megacore when B is
    # large enough; at TB=2048 the double-buffered f32 x tile is ~12.8 MiB,
    # which fits every generation once the scoped-VMEM limit is raised below.
    TB = max(16, min(batch_tile, _round_up(pl.cdiv(B, 2), 16)))
    grid = (pl.cdiv(B, TB),)   # ragged last block handled by Pallas masking

    flops = 2 * B * (IN_DIM * H1 + H1 * H2 + H2 * OUT_PAD)
    bytes_accessed = (
        B * IN_DIM * 4                                    # x (f32, single HBM pass)
        + (IN_DIM * H1 + H1 * H2 + H2 * OUT_PAD) * 2      # weights (bf16)
        + (H1 + H2 + OUT_PAD) * 4                         # biases (f32)
        + B * OUT_PAD * 2                                 # logits out (bf16)
    )

    out = pl.pallas_call(
        mlp_kernel,
        out_shape=jax.ShapeDtypeStruct((B, OUT_PAD), jnp.bfloat16),
        grid=grid,
        in_specs=[
            pl.BlockSpec((TB, IN_DIM), lambda i: (i, 0)),    # x: streamed + pipelined
            # Weights/biases: constant index_map -> fetched once, VMEM-resident
            # across all grid steps (extra buffer is only ~230 KiB, negligible
            # against the raised VMEM budget).
            pl.BlockSpec((IN_DIM, H1), lambda i: (0, 0)),
            pl.BlockSpec((1, H1), lambda i: (0, 0)),
            pl.BlockSpec((H1, H2), lambda i: (0, 0)),
            pl.BlockSpec((1, H2), lambda i: (0, 0)),
            pl.BlockSpec((H2, OUT_PAD), lambda i: (0, 0)),
            pl.BlockSpec((1, OUT_PAD), lambda i: (0, 0)),
        ],
        out_specs=pl.BlockSpec((TB, OUT_PAD), lambda i: (i, 0)),
        compiler_params=pltpu.CompilerParams(
            dimension_semantics=("parallel",),               # megacore on v7x
            vmem_limit_bytes=40 << 20,                       # fits v5e/v6e/v7x
        ),
        cost_estimate=pl.CostEstimate(
            flops=flops, transcendentals=0, bytes_accessed=bytes_accessed),
    )(x2d, w1b, b1, w2b, b2, w3p, b3p)

    # Tiny (B,128)->(B,10) slice on bf16; fuses with the downstream consumer.
    return out[:, :OUT]


def init_params(key):
    """Deterministic init matching nn.Linear shapes (stored transposed: (in, out))."""
    def linear(key, fan_in, fan_out):
        kw, kb = jax.random.split(key)
        bound = 1.0 / jnp.sqrt(fan_in)  # matches torch.nn.Linear default bound
        w = jax.random.uniform(kw, (fan_in, fan_out), jnp.float32, -bound, bound)
        b = jax.random.uniform(kb, (1, fan_out), jnp.float32, -bound, bound)
        return w, b

    k1, k2, k3 = jax.random.split(key, 3)
    w1, b1 = linear(k1, IN_DIM, H1)
    w2, b2 = linear(k2, H1, H2)
    w3, b3 = linear(k3, H2, OUT)
    return (w1, b1, w2, b2, w3, b3)


def reference_forward(x, params):
    """Pure-JAX reference with the same bf16 quantization as the kernel."""
    w1, b1, w2, b2, w3, b3 = params
    q = lambda a: a.astype(jnp.bfloat16).astype(jnp.float32)
    x = q(x.reshape(x.shape[0], -1))
    h1 = q(jnp.maximum(x @ q(w1) + b1, 0.0))
    h2 = q(jnp.maximum(h1 @ q(w2) + b2, 0.0))
    out = h2 @ q(w3) + b3
    return out.astype(jnp.bfloat16)   # kernel stores bf16 logits


if __name__ == "__main__":
    key = jax.random.PRNGKey(0)
    kx, kp = jax.random.split(key)

    B = 2  # small batch, MNIST-style 28x28 inputs (forward flattens to 784)
    x = jax.random.normal(kx, (B, 28, 28), dtype=jnp.float32)
    params = init_params(kp)
    prepped = prepare_params(params)

    out = net_forward(x, prepped)
    out = jax.block_until_ready(out)

    ref = reference_forward(x, params)
    assert out.shape == (B, OUT)
    err = jnp.max(jnp.abs(out.astype(jnp.float32) - ref.astype(jnp.float32)))
    assert jnp.allclose(out.astype(jnp.float32), ref.astype(jnp.float32),
                        atol=2e-2, rtol=2e-2), f"max abs err {err}"

    print("KERNEL_OK")
</pallas_src>

<mosaic_0001>
module attributes {stable_mosaic.version = 11 : i64} {
  func.func @mlp_kernel(%arg0: i32, %arg1: memref<16x784xf32, #tpu.memory_space<vmem>>, %arg2: memref<784x128xbf16, #tpu.memory_space<vmem>>, %arg3: memref<1x128xf32, #tpu.memory_space<vmem>>, %arg4: memref<128x64xbf16, #tpu.memory_space<vmem>>, %arg5: memref<1x64xf32, #tpu.memory_space<vmem>>, %arg6: memref<64x128xbf16, #tpu.memory_space<vmem>>, %arg7: memref<1x128xf32, #tpu.memory_space<vmem>>, %arg8: memref<16x128xbf16, #tpu.memory_space<vmem>>) attributes {dimension_semantics = [#tpu.dimension_semantics<parallel>], iteration_bounds = array<i64: 1>, scalar_prefetch = 0 : i64, scratch_operands = 0 : i64, tpu.core_type = #tpu.core_type<tc>, window_params = [{transform_indices = @transform_0, window_bounds = array<i64: 16, 784>}, {pipeline_mode = #tpu.pipeline_mode<synchronous>, transform_indices = @transform_1, window_bounds = array<i64: 784, 128>}, {pipeline_mode = #tpu.pipeline_mode<synchronous>, transform_indices = @transform_2, window_bounds = array<i64: 1, 128>}, {pipeline_mode = #tpu.pipeline_mode<synchronous>, transform_indices = @transform_3, window_bounds = array<i64: 128, 64>}, {pipeline_mode = #tpu.pipeline_mode<synchronous>, transform_indices = @transform_4, window_bounds = array<i64: 1, 64>}, {pipeline_mode = #tpu.pipeline_mode<synchronous>, transform_indices = @transform_5, window_bounds = array<i64: 64, 128>}, {pipeline_mode = #tpu.pipeline_mode<synchronous>, transform_indices = @transform_6, window_bounds = array<i64: 1, 128>}, {transform_indices = @transform_7, window_bounds = array<i64: 16, 128>}]} {
    %c0 = arith.constant 0 : index
    %c0_0 = arith.constant 0 : index
    %0 = vector.load %arg1[%c0, %c0_0] : memref<16x784xf32, #tpu.memory_space<vmem>>, vector<16x784xf32>
    %1 = arith.truncf %0 : vector<16x784xf32> to vector<16x784xbf16>
    %c0_1 = arith.constant 0 : index
    %c0_2 = arith.constant 0 : index
    %2 = vector.load %arg2[%c0_1, %c0_2] : memref<784x128xbf16, #tpu.memory_space<vmem>>, vector<784x128xbf16>
    %cst = arith.constant dense<0.000000e+00> : vector<16x128xf32>
    %3 = tpu.matmul %1, %2, %cst {dimension_numbers = #tpu.dot_dimension_numbers<[1], [0], [0], [1], [0, 0, 1, 1], [], []>} : vector<16x784xbf16>, vector<784x128xbf16>, vector<16x128xf32> -> vector<16x128xf32>
    %c0_3 = arith.constant 0 : index
    %c0_4 = arith.constant 0 : index
    %4 = vector.load %arg3[%c0_3, %c0_4] : memref<1x128xf32, #tpu.memory_space<vmem>>, vector<1x128xf32>
    %5 = vector.broadcast %4 : vector<1x128xf32> to vector<16x128xf32>
    %6 = arith.addf %3, %5 : vector<16x128xf32>
    %cst_5 = arith.constant 0.000000e+00 : f32
    %7 = vector.broadcast %cst_5 : f32 to vector<16x128xf32>
    %8 = arith.maximumf %6, %7 : vector<16x128xf32>
    %9 = arith.truncf %8 : vector<16x128xf32> to vector<16x128xbf16>
    %c0_6 = arith.constant 0 : index
    %c0_7 = arith.constant 0 : index
    %10 = vector.load %arg4[%c0_6, %c0_7] : memref<128x64xbf16, #tpu.memory_space<vmem>>, vector<128x64xbf16>
    %cst_8 = arith.constant dense<0.000000e+00> : vector<16x64xf32>
    %11 = tpu.matmul %9, %10, %cst_8 {dimension_numbers = #tpu.dot_dimension_numbers<[1], [0], [0], [1], [0, 0, 1, 1], [], []>} : vector<16x128xbf16>, vector<128x64xbf16>, vector<16x64xf32> -> vector<16x64xf32>
    %c0_9 = arith.constant 0 : index
    %c0_10 = arith.constant 0 : index
    %12 = vector.load %arg5[%c0_9, %c0_10] : memref<1x64xf32, #tpu.memory_space<vmem>>, vector<1x64xf32>
    %13 = vector.broadcast %12 : vector<1x64xf32> to vector<16x64xf32>
    %14 = arith.addf %11, %13 : vector<16x64xf32>
    %cst_11 = arith.constant 0.000000e+00 : f32
    %15 = vector.broadcast %cst_11 : f32 to vector<16x64xf32>
    %16 = arith.maximumf %14, %15 : vector<16x64xf32>
    %17 = arith.truncf %16 : vector<16x64xf32> to vector<16x64xbf16>
    %c0_12 = arith.constant 0 : index
    %c0_13 = arith.constant 0 : index
    %18 = vector.load %arg6[%c0_12, %c0_13] : memref<64x128xbf16, #tpu.memory_space<vmem>>, vector<64x128xbf16>
    %cst_14 = arith.constant dense<0.000000e+00> : vector<16x128xf32>
    %19 = tpu.matmul %17, %18, %cst_14 {dimension_numbers = #tpu.dot_dimension_numbers<[1], [0], [0], [1], [0, 0, 1, 1], [], []>} : vector<16x64xbf16>, vector<64x128xbf16>, vector<16x128xf32> -> vector<16x128xf32>
    %c0_15 = arith.constant 0 : index
    %c0_16 = arith.constant 0 : index
    %20 = vector.load %arg7[%c0_15, %c0_16] : memref<1x128xf32, #tpu.memory_space<vmem>>, vector<1x128xf32>
    %21 = vector.broadcast %20 : vector<1x128xf32> to vector<16x128xf32>
    %22 = arith.addf %19, %21 : vector<16x128xf32>
    %23 = arith.truncf %22 : vector<16x128xf32> to vector<16x128xbf16>
    %c0_17 = arith.constant 0 : index
    %c0_18 = arith.constant 0 : index
    %24 = vector.load %arg8[%c0_17, %c0_18] : memref<16x128xbf16, #tpu.memory_space<vmem>>, vector<16x128xbf16>
    tpu.vector_store %arg8[%c0_17, %c0_18], %23 {strides = array<i32>} : memref<16x128xbf16, #tpu.memory_space<vmem>>, vector<16x128xbf16>,
    return
  }
  func.func @transform_0(%arg0: i32) -> (i32, i32) {
    %c0_i32 = arith.constant 0 : i32
    %c0_i32_0 = arith.constant 0 : i32
    return %arg0, %c0_i32 : i32, i32
  }
  func.func @transform_1(%arg0: i32) -> (i32, i32) {
    %c0_i32 = arith.constant 0 : i32
    %c0_i32_0 = arith.constant 0 : i32
    %c0_i32_1 = arith.constant 0 : i32
    return %c0_i32, %c0_i32_0 : i32, i32
  }
  func.func @transform_2(%arg0: i32) -> (i32, i32) {
    %c0_i32 = arith.constant 0 : i32
    %c0_i32_0 = arith.constant 0 : i32
    %c0_i32_1 = arith.constant 0 : i32
    return %c0_i32, %c0_i32_0 : i32, i32
  }
  func.func @transform_3(%arg0: i32) -> (i32, i32) {
    %c0_i32 = arith.constant 0 : i32
    %c0_i32_0 = arith.constant 0 : i32
    %c0_i32_1 = arith.constant 0 : i32
    return %c0_i32, %c0_i32_0 : i32, i32
  }
  func.func @transform_4(%arg0: i32) -> (i32, i32) {
    %c0_i32 = arith.constant 0 : i32
    %c0_i32_0 = arith.constant 0 : i32
    %c0_i32_1 = arith.constant 0 : i32
    return %c0_i32, %c0_i32_0 : i32, i32
  }
  func.func @transform_5(%arg0: i32) -> (i32, i32) {
    %c0_i32 = arith.constant 0 : i32
    %c0_i32_0 = arith.constant 0 : i32
    %c0_i32_1 = arith.constant 0 : i32
    return %c0_i32, %c0_i32_0 : i32, i32
  }
  func.func @transform_6(%arg0: i32) -> (i32, i32) {
    %c0_i32 = arith.constant 0 : i32
    %c0_i32_0 = arith.constant 0 : i32
    %c0_i32_1 = arith.constant 0 : i32
    return %c0_i32, %c0_i32_0 : i32, i32
  }
  func.func @transform_7(%arg0: i32) -> (i32, i32) {
    %c0_i32 = arith.constant 0 : i32
    %c0_i32_0 = arith.constant 0 : i32
    return %arg0, %c0_i32 : i32, i32
  }
}

</mosaic_0001>

<llo_original>
// kernel: tpu_custom_call.1
$region0: #{tpu_custom_call.1}
  #allocation0 [shape = 'u32[]', space=smem, size = 0x4, offset = 0x4, fixed_abs, tag = 'smem constant byte address 0x4 - core index']
  #allocation1 [shape = 'u32[144,128]{1,0:T(1,128)}', space=vmem, size = 0x12000, scoped, tag = 'internal scratch']
  %s0 = inlined_call_operand.vmem [shape: f32[2,784], index: 0, kind: input, shape index: {}]
  %s1 = inlined_call_operand.hbm [shape: bf16[784,128], index: 1, kind: input, shape index: {}]
  %s2 = inlined_call_operand.vmem [shape: f32[1,128], index: 2, kind: input, shape index: {}]
  %s3 = inlined_call_operand.vmem [shape: bf16[128,64], index: 3, kind: input, shape index: {}]
  %s4 = inlined_call_operand.vmem [shape: f32[1,64], index: 4, kind: input, shape index: {}]
  %s5 = inlined_call_operand.vmem [shape: bf16[64,128], index: 5, kind: input, shape index: {}]
  %s6 = inlined_call_operand.vmem [shape: f32[1,128], index: 6, kind: input, shape index: {}]
  %s7 = inlined_call_operand.hbm [shape: bf16[2,128], index: 7, kind: output, shape index: {}]
  %s8 = sld [smem:[#allocation0]]
  $region42: #{tpu_custom_call.1} parent=0
    _
  %s10 = ssub.s32 1, %s8
  %s11 = scalar_select 0, %s10, %s8
  $region1: #{tpu_custom_call.1} parent=0
    #allocation2 [shape = 'u8[200704]{0}', space=vmem, size = 0x31000, scoped, tag = 'input window, operand 1, single buffered']
    #allocation3 [shape = 's32[1]{0}', space=sflag, size = 0x4, scoped, tag = 'scoped memory for tpu_custom_call.1']
    #allocation4 [shape = 's32[1]{0}', space=sflag, size = 0x4, scoped, tag = 'scoped memory for tpu_custom_call.1']
    #allocation5 [shape = 'u8[4096]{0}', space=vmem, size = 0x1000, scoped, tag = 'output window, operand 0, single buffered']
    %12 = vsyncpa [#allocation3], 0
    %13 = vsyncpa [#allocation4], 0
    // Predicated region
    $region2: #{tpu_custom_call.1} parent=1 // pred_check
      _
    $region3: #{tpu_custom_call.1} parent=1 // pred_check_branch
      %15 = sbr.rel (0) target = $region5
    $region4: #{tpu_custom_call.1} parent=1 // pred_region
      _
    $region5: #{tpu_custom_call.1} parent=1 // pred_fallthru
      _
    // Predicated region
    $region6: #{tpu_custom_call.1} parent=1 // pred_check
      _
    $region7: #{tpu_custom_call.1} parent=1 // pred_check_branch
      %17 = sbr.rel (0) target = $region9
    $region8: #{tpu_custom_call.1} parent=1 // pred_region
      %s19 = ssub.s32 6272, 6272
      %20 = vsyncadd [#allocation3], %s19
      %s21 = sshll.u32 [#allocation2], 4
      %s22 = int_to_ptr.vmem [resolvable:$true] %s21
      %27 = dma.hbm_to_vmem [thread:$0]  %s1, 6272, %s22, [#allocation3], 64, 64, 4
    $region9: #{tpu_custom_call.1} parent=1 // pred_fallthru
      _
    // Predicated region
    $region10: #{tpu_custom_call.1} parent=1 // pred_check
      _
    $region11: #{tpu_custom_call.1} parent=1 // pred_check_branch
      %29 = sbr.rel (0) target = $region13
    $region12: #{tpu_custom_call.1} parent=1 // pred_region
      _
    $region13: #{tpu_custom_call.1} parent=1 // pred_fallthru
      _
    // Predicated region
    $region14: #{tpu_custom_call.1} parent=1 // pred_check
      _
    $region15: #{tpu_custom_call.1} parent=1 // pred_check_branch
      %31 = sbr.rel (0) target = $region17
    $region16: #{tpu_custom_call.1} parent=1 // pred_region
      _
    $region17: #{tpu_custom_call.1} parent=1 // pred_fallthru
      _
    // Predicated region
    $region18: #{tpu_custom_call.1} parent=1 // pred_check
      _
    $region19: #{tpu_custom_call.1} parent=1 // pred_check_branch
      %33 = sbr.rel (0) target = $region21
    $region20: #{tpu_custom_call.1} parent=1 // pred_region
      _
    $region21: #{tpu_custom_call.1} parent=1 // pred_fallthru
      _
    // Predicated region
    $region22: #{tpu_custom_call.1} parent=1 // pred_check
      _
    $region23: #{tpu_custom_call.1} parent=1 // pred_check_branch
      %35 = sbr.rel (0) target = $region25
    $region24: #{tpu_custom_call.1} parent=1 // pred_region
      _
    $region25: #{tpu_custom_call.1} parent=1 // pred_fallthru
      _
    // Predicated region
    $region26: #{tpu_custom_call.1} parent=1 // pred_check
      _
    $region27: #{tpu_custom_call.1} parent=1 // pred_check_branch
      %37 = sbr.rel (0) target = $region29
    $region28: #{tpu_custom_call.1} parent=1 // pred_region
      _
    $region29: #{tpu_custom_call.1} parent=1 // pred_fallthru
      _
    // Predicated region
    $region30: #{tpu_custom_call.1} parent=1 // pred_check
      _
    $region31: #{tpu_custom_call.1} parent=1 // pred_check_branch
      %39 = sbr.rel (0) target = $region33
    $region32: #{tpu_custom_call.1} parent=1 // pred_region
      %40 = dma.done [#allocation3], 6272
    $region33: #{tpu_custom_call.1} parent=1 // pred_fallthru
      _
    %v42 = vld [vmem:[%s0] sm:$0xff]
    %v43 = vld [vmem:[%s0 + $0x8] sm:$0x3f]
    %v44 = vld [vmem:[%s0 + $0xe] sm:$0xff]
    %v45 = vld [vmem:[%s0 + $0x16] sm:$0x3f]
    %v46 = vld [vmem:[%s0 + $0x1c] sm:$0xff]
    %v47 = vld [vmem:[%s0 + $0x24] sm:$0x3f]
    %v48 = vld [vmem:[%s0 + $0x2a] sm:$0xff]
    %v49 = vld [vmem:[%s0 + $0x32] sm:$0x3f]
    %v50 = vld [vmem:[%s0 + $0x38] sm:$0xff]
    %v51 = vld [vmem:[%s0 + $0x40] sm:$0x3f]
    %v52 = vld [vmem:[%s0 + $0x46] sm:$0xff]
    %v53 = vld [vmem:[%s0 + $0x4e] sm:$0x3f]
    %v54 = vld [vmem:[%s0 + $0x54] sm:$0xff]
    %v55 = vld [vmem:[%s0 + $0x5c] sm:$0x3f]
    %v56 = vld [vmem:[%s0 + $0x62] sm:$0xff]
    %v57 = vld [vmem:[%s0 + $0x6a] sm:$0x3f]
    %v74 = vcombine.low %v42, %v44
    %v75 = vcombine.high %v42, %v44
    %v76 = vcombine.low %v46, %v48
    %v77 = vcombine.high %v46, %v48
    %v79 = vunpack.c.l.s4 1983009808
    %v80 = vunpack.c.0.s8 %v79
    %v81 = vlaneseq
    %v82 = vshrl.u32 %v81, 7
    %v83 = vsub.s32 %v80, %v82
    %v84 = vrot.slane %v74, %v83
    %v86 = vunpack.c.l.s4 1983009808
    %v87 = vunpack.c.0.s8 %v86
    %v88 = vlaneseq
    %v89 = vshrl.u32 %v88, 7
    %v90 = vsub.s32 %v87, %v89
    %v91 = vrot.slane %v75, %v90
    %v93 = vunpack.c.l.s4 1983009808
    %v94 = vunpack.c.0.s8 %v93
    %v95 = vlaneseq
    %v96 = vshrl.u32 %v95, 7
    %v97 = vsub.s32 %v94, %v96
    %v98 = vrot.slane %v76, %v97
    %v100 = vunpack.c.l.s4 1983009808
    %v101 = vunpack.c.0.s8 %v100
    %v102 = vlaneseq
    %v103 = vshrl.u32 %v102, 7
    %v104 = vsub.s32 %v101, %v103
    %v105 = vrot.slane %v77, %v104
    %v106 = vcombine.low %v84, %v98
    %v107 = vcombine.high %v84, %v98
    %v108 = vcombine.low %v91, %v105
    %v109 = vcombine.high %v91, %v105
    %v110 = vcombine.low %v43, %v45
    %v111 = vcombine.high %v43, %v45
    %v112 = vcombine.low %v47, %v49
    %v113 = vcombine.high %v47, %v49
    %v115 = vunpack.c.l.s4 1983009808
    %v116 = vunpack.c.0.s8 %v115
    %v117 = vlaneseq
    %v118 = vshrl.u32 %v117, 7
    %v119 = vsub.s32 %v116, %v118
    %v120 = vrot.slane %v110, %v119
    %v122 = vunpack.c.l.s4 1983009808
    %v123 = vunpack.c.0.s8 %v122
    %v124 = vlaneseq
    %v125 = vshrl.u32 %v124, 7
    %v126 = vsub.s32 %v123, %v125
    %v127 = vrot.slane %v111, %v126
    %v129 = vunpack.c.l.s4 1983009808
    %v130 = vunpack.c.0.s8 %v129
    %v131 = vlaneseq
    %v132 = vshrl.u32 %v131, 7
    %v133 = vsub.s32 %v130, %v132
    %v134 = vrot.slane %v112, %v133
    %v136 = vunpack.c.l.s4 1983009808
    %v137 = vunpack.c.0.s8 %v136
    %v138 = vlaneseq
    %v139 = vshrl.u32 %v138, 7
    %v140 = vsub.s32 %v137, %v139
    %v141 = vrot.slane %v113, %v140
    %v142 = vcombine.low %v120, %v134
    %v143 = vcombine.high %v120, %v134
    %v144 = vcombine.low %v127, %v141
    %v145 = vcombine.low %v50, %v52
    %v146 = vcombine.high %v50, %v52
    %v147 = vcombine.low %v54, %v56
    %v148 = vcombine.high %v54, %v56
    %v150 = vunpack.c.l.s4 1983009808
    %v151 = vunpack.c.0.s8 %v150
    %v152 = vlaneseq
    %v153 = vshrl.u32 %v152, 7
    %v154 = vsub.s32 %v151, %v153
    %v155 = vrot.slane %v145, %v154
    %v157 = vunpack.c.l.s4 1983009808
    %v158 = vunpack.c.0.s8 %v157
    %v159 = vlaneseq
    %v160 = vshrl.u32 %v159, 7
    %v161 = vsub.s32 %v158, %v160
    %v162 = vrot.slane %v146, %v161
    %v164 = vunpack.c.l.s4 1983009808
    %v165 = vunpack.c.0.s8 %v164
    %v166 = vlaneseq
    %v167 = vshrl.u32 %v166, 7
    %v168 = vsub.s32 %v165, %v167
    %v169 = vrot.slane %v147, %v168
    %v171 = vunpack.c.l.s4 1983009808
    %v172 = vunpack.c.0.s8 %v171
    %v173 = vlaneseq
    %v174 = vshrl.u32 %v173, 7
    %v175 = vsub.s32 %v172, %v174
    %v176 = vrot.slane %v148, %v175
    %v177 = vcombine.low %v155, %v169
    %v178 = vcombine.high %v155, %v169
    %v179 = vcombine.low %v162, %v176
    %v180 = vcombine.high %v162, %v176
    %v181 = vcombine.low %v51, %v53
    %v182 = vcombine.high %v51, %v53
    %v183 = vcombine.low %v55, %v57
    %v184 = vcombine.high %v55, %v57
    %v186 = vunpack.c.l.s4 1983009808
    %v187 = vunpack.c.0.s8 %v186
    %v188 = vlaneseq
    %v189 = vshrl.u32 %v188, 7
    %v190 = vsub.s32 %v187, %v189
    %v191 = vrot.slane %v181, %v190
    %v193 = vunpack.c.l.s4 1983009808
    %v194 = vunpack.c.0.s8 %v193
    %v195 = vlaneseq
    %v196 = vshrl.u32 %v195, 7
    %v197 = vsub.s32 %v194, %v196
    %v198 = vrot.slane %v182, %v197
    %v200 = vunpack.c.l.s4 1983009808
    %v201 = vunpack.c.0.s8 %v200
    %v202 = vlaneseq
    %v203 = vshrl.u32 %v202, 7
    %v204 = vsub.s32 %v201, %v203
    %v205 = vrot.slane %v183, %v204
    %v207 = vunpack.c.l.s4 1983009808
    %v208 = vunpack.c.0.s8 %v207
    %v209 = vlaneseq
    %v210 = vshrl.u32 %v209, 7
    %v211 = vsub.s32 %v208, %v210
    %v212 = vrot.slane %v184, %v211
    %v213 = vcombine.low %v191, %v205
    %v214 = vcombine.high %v191, %v205
    %v215 = vcombine.low %v198, %v212
    %v230 = vpack.c.bf16 %v177, %v106
    %v231 = vpack.c.bf16 %v178, %v107
    %v232 = vpack.c.bf16 %v179, %v108
    %v233 = vpack.c.bf16 %v180, %v109
    %v234 = vpack.c.bf16 %v213, %v142
    %v235 = vpack.c.bf16 %v214, %v143
    %v236 = vpack.c.bf16 %v215, %v144
    %v237 = vld [vmem:[#allocation2] sm:$0xf]
    %v238 = vld [vmem:[#allocation2 + $0x4] sm:$0xf]
    %v239 = vld [vmem:[#allocation2 + $0x8] sm:$0xf]
    %v240 = vld [vmem:[#allocation2 + $0xc] sm:$0xf]
    %v241 = vld [vmem:[#allocation2 + $0x10] sm:$0xf]
    %v242 = vld [vmem:[#allocation2 + $0x14] sm:$0xf]
    %v243 = vld [vmem:[#allocation2 + $0x18] sm:$0xf]
    %v244 = vld [vmem:[#allocation2 + $0x1c] sm:$0xf]
    %v245 = vld [vmem:[#allocation2 + $0x20] sm:$0xf]
    %v246 = vld [vmem:[#allocation2 + $0x24] sm:$0xf]
    %v247 = vld [vmem:[#allocation2 + $0x28] sm:$0xf]
    %v248 = vld [vmem:[#allocation2 + $0x2c] sm:$0xf]
    %v249 = vld [vmem:[#allocation2 + $0x30] sm:$0xf]
    %v250 = vld [vmem:[#allocation2 + $0x34] sm:$0xf]
    %v251 = vld [vmem:[#allocation2 + $0x38] sm:$0xf]
    %v252 = vld [vmem:[#allocation2 + $0x3c] sm:$0xf]
    %v253 = vld [vmem:[#allocation2 + $0x40] sm:$0xf]
    %v254 = vld [vmem:[#allocation2 + $0x44] sm:$0xf]
    %v255 = vld [vmem:[#allocation2 + $0x48] sm:$0xf]
    %v256 = vld [vmem:[#allocation2 + $0x4c] sm:$0xf]
    %v257 = vld [vmem:[#allocation2 + $0x50] sm:$0xf]
    %v258 = vld [vmem:[#allocation2 + $0x54] sm:$0xf]
    %v259 = vld [vmem:[#allocation2 + $0x58] sm:$0xf]
    %v260 = vld [vmem:[#allocation2 + $0x5c] sm:$0xf]
    %v261 = vld [vmem:[#allocation2 + $0x60] sm:$0xf]
    %v262 = vld [vmem:[#allocation2 + $0x64] sm:$0xf]
    %v263 = vld [vmem:[#allocation2 + $0x68] sm:$0xf]
    %v264 = vld [vmem:[#allocation2 + $0x6c] sm:$0xf]
    %v265 = vld [vmem:[#allocation2 + $0x70] sm:$0xf]
    %v266 = vld [vmem:[#allocation2 + $0x74] sm:$0xf]
    %v267 = vld [vmem:[#allocation2 + $0x78] sm:$0xf]
    %v268 = vld [vmem:[#allocation2 + $0x7c] sm:$0xf]
    %v269 = vld [vmem:[#allocation2 + $0x80] sm:$0xf]
    %v270 = vld [vmem:[#allocation2 + $0x84] sm:$0xf]
    %v271 = vld [vmem:[#allocation2 + $0x88] sm:$0xf]
    %v272 = vld [vmem:[#allocation2 + $0x8c] sm:$0xf]
    %v273 = vld [vmem:[#allocation2 + $0x90] sm:$0xf]
    %v274 = vld [vmem:[#allocation2 + $0x94] sm:$0xf]
    %v275 = vld [vmem:[#allocation2 + $0x98] sm:$0xf]
    %v276 = vld [vmem:[#allocation2 + $0x9c] sm:$0xf]
    %v277 = vld [vmem:[#allocation2 + $0xa0] sm:$0xf]
    %v278 = vld [vmem:[#allocation2 + $0xa4] sm:$0xf]
    %v279 = vld [vmem:[#allocation2 + $0xa8] sm:$0xf]
    %v280 = vld [vmem:[#allocation2 + $0xac] sm:$0xf]
    %v281 = vld [vmem:[#allocation2 + $0xb0] sm:$0xf]
    %v282 = vld [vmem:[#allocation2 + $0xb4] sm:$0xf]
    %v283 = vld [vmem:[#allocation2 + $0xb8] sm:$0xf]
    %v284 = vld [vmem:[#allocation2 + $0xbc] sm:$0xf]
    %v285 = vld [vmem:[#allocation2 + $0xc0] sm:$0xf]
    %v286 = vld [vmem:[#allocation2 + $0xc4] sm:$0xf]
    %v287 = vld [vmem:[#allocation2 + $0xc8] sm:$0xf]
    %v288 = vld [vmem:[#allocation2 + $0xcc] sm:$0xf]
    %v289 = vld [vmem:[#allocation2 + $0xd0] sm:$0xf]
    %v290 = vld [vmem:[#allocation2 + $0xd4] sm:$0xf]
    %v291 = vld [vmem:[#allocation2 + $0xd8] sm:$0xf]
    %v292 = vld [vmem:[#allocation2 + $0xdc] sm:$0xf]
    %v293 = vld [vmem:[#allocation2 + $0xe0] sm:$0xf]
    %v294 = vld [vmem:[#allocation2 + $0xe4] sm:$0xf]
    %v295 = vld [vmem:[#allocation2 + $0xe8] sm:$0xf]
    %v296 = vld [vmem:[#allocation2 + $0xec] sm:$0xf]
    %v297 = vld [vmem:[#allocation2 + $0xf0] sm:$0xf]
    %v298 = vld [vmem:[#allocation2 + $0xf4] sm:$0xf]
    %v299 = vld [vmem:[#allocation2 + $0xf8] sm:$0xf]
    %v300 = vld [vmem:[#allocation2 + $0xfc] sm:$0xf]
    %v301 = vld [vmem:[#allocation2 + $0x100] sm:$0xf]
    %v302 = vld [vmem:[#allocation2 + $0x104] sm:$0xf]
    %v303 = vld [vmem:[#allocation2 + $0x108] sm:$0xf]
    %v304 = vld [vmem:[#allocation2 + $0x10c] sm:$0xf]
    %v305 = vld [vmem:[#allocation2 + $0x110] sm:$0xf]
    %v306 = vld [vmem:[#allocation2 + $0x114] sm:$0xf]
    %v307 = vld [vmem:[#allocation2 + $0x118] sm:$0xf]
    %v308 = vld [vmem:[#allocation2 + $0x11c] sm:$0xf]
    %v309 = vld [vmem:[#allocation2 + $0x120] sm:$0xf]
    %v310 = vld [vmem:[#allocation2 + $0x124] sm:$0xf]
    %v311 = vld [vmem:[#allocation2 + $0x128] sm:$0xf]
    %v312 = vld [vmem:[#allocation2 + $0x12c] sm:$0xf]
    %v313 = vld [vmem:[#allocation2 + $0x130] sm:$0xf]
    %v314 = vld [vmem:[#allocation2 + $0x134] sm:$0xf]
    %v315 = vld [vmem:[#allocation2 + $0x138] sm:$0xf]
    %v316 = vld [vmem:[#allocation2 + $0x13c] sm:$0xf]
    %v317 = vld [vmem:[#allocation2 + $0x140] sm:$0xf]
    %v318 = vld [vmem:[#allocation2 + $0x144] sm:$0xf]
    %v319 = vld [vmem:[#allocation2 + $0x148] sm:$0xf]
    %v320 = vld [vmem:[#allocation2 + $0x14c] sm:$0xf]
    %v321 = vld [vmem:[#allocation2 + $0x150] sm:$0xf]
    %v322 = vld [vmem:[#allocation2 + $0x154] sm:$0xf]
    %v323 = vld [vmem:[#allocation2 + $0x158] sm:$0xf]
    %v324 = vld [vmem:[#allocation2 + $0x15c] sm:$0xf]
    %v325 = vld [vmem:[#allocation2 + $0x160] sm:$0xf]
    %v326 = vld [vmem:[#allocation2 + $0x164] sm:$0xf]
    %v327 = vld [vmem:[#allocation2 + $0x168] sm:$0xf]
    %v328 = vld [vmem:[#allocation2 + $0x16c] sm:$0xf]
    %v329 = vld [vmem:[#allocation2 + $0x170] sm:$0xf]
    %v330 = vld [vmem:[#allocation2 + $0x174] sm:$0xf]
    %v331 = vld [vmem:[#allocation2 + $0x178] sm:$0xf]
    %v332 = vld [vmem:[#allocation2 + $0x17c] sm:$0xf]
    %v333 = vld [vmem:[#allocation2 + $0x180] sm:$0xf]
    %v334 = vld [vmem:[#allocation2 + $0x184] sm:$0xf]
    %v335 = vld [vmem:[%s2] sm:$0x1]
    %v337 = vlaneseq
    %v338 = vshrl.u32 %v337, 7
    %v339 = vsub.s32 0, %v338
    %v340 = vrot.slane %v335, %v339
    %v440 = vunpack.c.l.b16 %v237
    %v441 = vunpack.c.l.b16 %v238
    %v442 = vunpack.c.l.b16 %v239
    %v443 = vunpack.c.l.b16 %v240
    %v444 = vunpack.c.l.b16 %v241
    %v445 = vunpack.c.l.b16 %v242
    %v446 = vunpack.c.l.b16 %v243
    %v447 = vunpack.c.l.b16 %v244
    %v448 = vunpack.c.l.b16 %v245
    %v449 = vunpack.c.l.b16 %v246
    %v450 = vunpack.c.l.b16 %v247
    %v451 = vunpack.c.l.b16 %v248
    %v452 = vunpack.c.l.b16 %v249
    %v453 = vunpack.c.l.b16 %v250
    %v454 = vunpack.c.l.b16 %v251
    %v455 = vunpack.c.l.b16 %v252
    %v456 = vunpack.c.l.b16 %v253
    %v457 = vunpack.c.l.b16 %v254
    %v458 = vunpack.c.l.b16 %v255
    %v459 = vunpack.c.l.b16 %v256
    %v460 = vunpack.c.l.b16 %v257
    %v461 = vunpack.c.l.b16 %v258
    %v462 = vunpack.c.l.b16 %v259
    %v463 = vunpack.c.l.b16 %v260
    %v464 = vunpack.c.l.b16 %v261
    %v465 = vunpack.c.l.b16 %v262
    %v466 = vunpack.c.l.b16 %v263
    %v467 = vunpack.c.l.b16 %v264
    %v468 = vunpack.c.l.b16 %v265
    %v469 = vunpack.c.l.b16 %v266
    %v470 = vunpack.c.l.b16 %v267
    %v471 = vunpack.c.l.b16 %v268
    %v472 = vunpack.c.l.b16 %v269
    %v473 = vunpack.c.l.b16 %v270
    %v474 = vunpack.c.l.b16 %v271
    %v475 = vunpack.c.l.b16 %v272
    %v476 = vunpack.c.l.b16 %v273
    %v477 = vunpack.c.l.b16 %v274
    %v478 = vunpack.c.l.b16 %v275
    %v479 = vunpack.c.l.b16 %v276
    %v480 = vunpack.c.l.b16 %v277
    %v481 = vunpack.c.l.b16 %v278
    %v482 = vunpack.c.l.b16 %v279
    %v483 = vunpack.c.l.b16 %v280
    %v484 = vunpack.c.l.b16 %v281
    %v485 = vunpack.c.l.b16 %v282
    %v486 = vunpack.c.l.b16 %v283
    %v487 = vunpack.c.l.b16 %v284
    %v488 = vunpack.c.l.b16 %v285
    %v489 = vunpack.c.l.b16 %v286
    %v490 = vunpack.c.l.b16 %v287
    %v491 = vunpack.c.l.b16 %v288
    %v492 = vunpack.c.l.b16 %v289
    %v493 = vunpack.c.l.b16 %v290
    %v494 = vunpack.c.l.b16 %v291
    %v495 = vunpack.c.l.b16 %v292
    %v496 = vunpack.c.l.b16 %v293
    %v497 = vunpack.c.l.b16 %v294
    %v498 = vunpack.c.l.b16 %v295
    %v499 = vunpack.c.l.b16 %v296
    %v500 = vunpack.c.l.b16 %v297
    %v501 = vunpack.c.l.b16 %v298
    %v502 = vunpack.c.l.b16 %v299
    %v503 = vunpack.c.l.b16 %v300
    %v504 = vunpack.c.l.b16 %v301
    %v505 = vunpack.c.l.b16 %v302
    %v506 = vunpack.c.l.b16 %v303
    %v507 = vunpack.c.l.b16 %v304
    %v508 = vunpack.c.l.b16 %v305
    %v509 = vunpack.c.l.b16 %v306
    %v510 = vunpack.c.l.b16 %v307
    %v511 = vunpack.c.l.b16 %v308
    %v512 = vunpack.c.l.b16 %v309
    %v513 = vunpack.c.l.b16 %v310
    %v514 = vunpack.c.l.b16 %v311
    %v515 = vunpack.c.l.b16 %v312
    %v516 = vunpack.c.l.b16 %v313
    %v517 = vunpack.c.l.b16 %v314
    %v518 = vunpack.c.l.b16 %v315
    %v519 = vunpack.c.l.b16 %v316
    %v520 = vunpack.c.l.b16 %v317
    %v521 = vunpack.c.l.b16 %v318
    %v522 = vunpack.c.l.b16 %v319
    %v523 = vunpack.c.l.b16 %v320
    %v524 = vunpack.c.l.b16 %v321
    %v525 = vunpack.c.l.b16 %v322
    %v526 = vunpack.c.l.b16 %v323
    %v527 = vunpack.c.l.b16 %v324
    %v528 = vunpack.c.l.b16 %v325
    %v529 = vunpack.c.l.b16 %v326
    %v530 = vunpack.c.l.b16 %v327
    %v531 = vunpack.c.l.b16 %v328
    %v532 = vunpack.c.l.b16 %v329
    %v533 = vunpack.c.l.b16 %v330
    %v534 = vunpack.c.l.b16 %v331
    %v535 = vunpack.c.l.b16 %v332
    %v536 = vunpack.c.l.b16 %v333
    %v537 = vunpack.c.l.b16 %v334
    %v538 = vpack.c.b16 %v441, %v440
    %v539 = vpack.c.b16 %v443, %v442
    %v540 = vpack.c.b16 %v445, %v444
    %v541 = vpack.c.b16 %v447, %v446
    %v542 = vpack.c.b16 %v449, %v448
    %v543 = vpack.c.b16 %v451, %v450
    %v544 = vpack.c.b16 %v453, %v452
    %v545 = vpack.c.b16 %v455, %v454
    %v546 = vpack.c.b16 %v457, %v456
    %v547 = vpack.c.b16 %v459, %v458
    %v548 = vpack.c.b16 %v461, %v460
    %v549 = vpack.c.b16 %v463, %v462
    %v550 = vpack.c.b16 %v465, %v464
    %v551 = vpack.c.b16 %v467, %v466
    %v552 = vpack.c.b16 %v469, %v468
    %v553 = vpack.c.b16 %v471, %v470
    %v554 = vpack.c.b16 %v473, %v472
    %v555 = vpack.c.b16 %v475, %v474
    %v556 = vpack.c.b16 %v477, %v476
    %v557 = vpack.c.b16 %v479, %v478
    %v558 = vpack.c.b16 %v481, %v480
    %v559 = vpack.c.b16 %v483, %v482
    %v560 = vpack.c.b16 %v485, %v484
    %v561 = vpack.c.b16 %v487, %v486
    %v562 = vpack.c.b16 %v489, %v488
    %v563 = vpack.c.b16 %v491, %v490
    %v564 = vpack.c.b16 %v493, %v492
    %v565 = vpack.c.b16 %v495, %v494
    %v566 = vpack.c.b16 %v497, %v496
    %v567 = vpack.c.b16 %v499, %v498
    %v568 = vpack.c.b16 %v501, %v500
    %v569 = vpack.c.b16 %v503, %v502
    %v570 = vpack.c.b16 %v505, %v504
    %v571 = vpack.c.b16 %v507, %v506
    %v572 = vpack.c.b16 %v509, %v508
    %v573 = vpack.c.b16 %v511, %v510
    %v574 = vpack.c.b16 %v513, %v512
    %v575 = vpack.c.b16 %v515, %v514
    %v576 = vpack.c.b16 %v517, %v516
    %v577 = vpack.c.b16 %v519, %v518
    %v578 = vpack.c.b16 %v521, %v520
    %v579 = vpack.c.b16 %v523, %v522
    %v580 = vpack.c.b16 %v525, %v524
    %v581 = vpack.c.b16 %v527, %v526
    %v582 = vpack.c.b16 %v529, %v528
    %v583 = vpack.c.b16 %v531, %v530
    %v584 = vpack.c.b16 %v533, %v532
    %v585 = vpack.c.b16 %v535, %v534
    %v586 = vpack.c.b16 %v537, %v536
    %vm636 = vcmask 130048
    %v638 = vsel %vm636, %v236, 0
    %640 = vmatprep.subr.bf16.mxu0 0
    %641 = vmatpush1.bf16.msra.mxu0 %v545
    %642 = vmatprep.subr.bf16.mxu0 0
    %643 = vmatpush1.bf16.msra.mxu0 %v544
    %644 = vmatprep.subr.bf16.mxu0 0
    %645 = vmatpush1.bf16.msra.mxu0 %v543
    %646 = vmatprep.subr.bf16.mxu0 0
    %647 = vmatpush1.bf16.msra.mxu0 %v542
    %648 = vmatprep.subr.bf16.mxu0 0
    %649 = vmatpush1.bf16.msra.mxu0 %v541
    %650 = vmatprep.subr.bf16.mxu0 0
    %651 = vmatpush1.bf16.msra.mxu0 %v540
    %652 = vmatprep.subr.bf16.mxu0 0
    %653 = vmatpush1.bf16.msra.mxu0 %v539
    %654 = vmatprep.subr.bf16.mxu0 0
    %655 = vmatpush1.bf16.msra.mxu0 %v538
    %656 = vmatprep.subr.bf16.mxu0 0
    %657 = vmatpush2.bf16.msra.mxu0 %v553
    %658 = vmatprep.subr.bf16.mxu0 0
    %659 = vmatpush2.bf16.msra.mxu0 %v552
    %660 = vmatprep.subr.bf16.mxu0 0
    %661 = vmatpush2.bf16.msra.mxu0 %v551
    %662 = vmatprep.subr.bf16.mxu0 0
    %663 = vmatpush2.bf16.msra.mxu0 %v550
    %664 = vmatprep.subr.bf16.mxu0 0
    %665 = vmatpush2.bf16.msra.mxu0 %v549
    %666 = vmatprep.subr.bf16.mxu0 0
    %667 = vmatpush2.bf16.msra.mxu0 %v548
    %668 = vmatprep.subr.bf16.mxu0 0
    %669 = vmatpush2.bf16.msra.mxu0 %v547
    %670 = vmatprep.subr.bf16.mxu0 0
    %671 = vmatpush2.bf16.msra.mxu0 %v546
    %672 = vmatprep.mubr.bf16.mxu0 %v231
    %673 = vmatmul.mubr.bf16.gmra.mxu0 %v230
    %v674 = vpop.f32.mrf.mxu0
    %v675 = vadd.f32 %v340, %v674
    %v676 = vpop.f32.mrf.mxu0
    %v677 = vpop.f32.mrf.mxu0
    %v678 = vadd.f32 %v340, %v677
    %v679 = vpop.f32.mrf.mxu0
    %680 = vdwg.mxu0
    %681 = vmatprep.subr.bf16.mxu0 0
    %682 = vmatpush1.bf16.msra.mxu0 %v561
    %683 = vmatprep.subr.bf16.mxu0 0
    %684 = vmatpush1.bf16.msra.mxu0 %v560
    %685 = vmatprep.subr.bf16.mxu0 0
    %686 = vmatpush1.bf16.msra.mxu0 %v559
    %687 = vmatprep.subr.bf16.mxu0 0
    %688 = vmatpush1.bf16.msra.mxu0 %v558
    %689 = vmatprep.subr.bf16.mxu0 0
    %690 = vmatpush1.bf16.msra.mxu0 %v557
    %691 = vmatprep.subr.bf16.mxu0 0
    %692 = vmatpush1.bf16.msra.mxu0 %v556
    %693 = vmatprep.subr.bf16.mxu0 0
    %694 = vmatpush1.bf16.msra.mxu0 %v555
    %695 = vmatprep.subr.bf16.mxu0 0
    %696 = vmatpush1.bf16.msra.mxu0 %v554
    %697 = vmatprep.subr.bf16.mxu0 0
    %698 = vmatpush2.bf16.msra.mxu0 %v569
    %699 = vmatprep.subr.bf16.mxu0 0
    %700 = vmatpush2.bf16.msra.mxu0 %v568
    %701 = vmatprep.subr.bf16.mxu0 0
    %702 = vmatpush2.bf16.msra.mxu0 %v567
    %703 = vmatprep.subr.bf16.mxu0 0
    %704 = vmatpush2.bf16.msra.mxu0 %v566
    %705 = vmatprep.subr.bf16.mxu0 0
    %706 = vmatpush2.bf16.msra.mxu0 %v565
    %707 = vmatprep.subr.bf16.mxu0 0
    %708 = vmatpush2.bf16.msra.mxu0 %v564
    %709 = vmatprep.subr.bf16.mxu0 0
    %710 = vmatpush2.bf16.msra.mxu0 %v563
    %711 = vmatprep.subr.bf16.mxu0 0
    %712 = vmatpush2.bf16.msra.mxu0 %v562
    %713 = vmatprep.mubr.bf16.mxu0 %v233
    %714 = vmatmul.mubr.bf16.gmra.mxu0 %v232
    %v715 = vpop.f32.mrf.mxu0
    %v716 = vadd.f32 %v675, %v715
    %v717 = vpop.f32.mrf.mxu0
    %v718 = vpop.f32.mrf.mxu0
    %v719 = vadd.f32 %v678, %v718
    %v720 = vpop.f32.mrf.mxu0
    %721 = vdwg.mxu0
    %722 = vmatprep.subr.bf16.mxu0 0
    %723 = vmatpush1.bf16.msra.mxu0 %v577
    %724 = vmatprep.subr.bf16.mxu0 0
    %725 = vmatpush1.bf16.msra.mxu0 %v576
    %726 = vmatprep.subr.bf16.mxu0 0
    %727 = vmatpush1.bf16.msra.mxu0 %v575
    %728 = vmatprep.subr.bf16.mxu0 0
    %729 = vmatpush1.bf16.msra.mxu0 %v574
    %730 = vmatprep.subr.bf16.mxu0 0
    %731 = vmatpush1.bf16.msra.mxu0 %v573
    %732 = vmatprep.subr.bf16.mxu0 0
    %733 = vmatpush1.bf16.msra.mxu0 %v572
    %734 = vmatprep.subr.bf16.mxu0 0
    %735 = vmatpush1.bf16.msra.mxu0 %v571
    %736 = vmatprep.subr.bf16.mxu0 0
    %737 = vmatpush1.bf16.msra.mxu0 %v570
    %738 = vmatprep.subr.bf16.mxu0 0
    %739 = vmatpush2.bf16.msra.mxu0 %v585
    %740 = vmatprep.subr.bf16.mxu0 0
    %741 = vmatpush2.bf16.msra.mxu0 %v584
    %742 = vmatprep.subr.bf16.mxu0 0
    %743 = vmatpush2.bf16.msra.mxu0 %v583
    %744 = vmatprep.subr.bf16.mxu0 0
    %745 = vmatpush2.bf16.msra.mxu0 %v582
    %746 = vmatprep.subr.bf16.mxu0 0
    %747 = vmatpush2.bf16.msra.mxu0 %v581
    %748 = vmatprep.subr.bf16.mxu0 0
    %749 = vmatpush2.bf16.msra.mxu0 %v580
    %750 = vmatprep.subr.bf16.mxu0 0
    %751 = vmatpush2.bf16.msra.mxu0 %v579
    %752 = vmatprep.subr.bf16.mxu0 0
    %753 = vmatpush2.bf16.msra.mxu0 %v578
    %754 = vmatprep.mubr.bf16.mxu0 %v235
    %755 = vmatmul.mubr.bf16.gmra.mxu0 %v234
    %v756 = vpop.f32.mrf.mxu0
    %v757 = vadd.f32 %v716, %v756
    %v758 = vpop.f32.mrf.mxu0
    %v759 = vpop.f32.mrf.mxu0
    %v760 = vadd.f32 %v719, %v759
    %v761 = vpop.f32.mrf.mxu0
    %762 = vdwg.mxu0
    %763 = vmatprep.subr.bf16.mxu0 0
    %764 = vmatpush1.bf16.msra.mxu0 0
    %765 = vmatprep.subr.bf16.mxu0 0
    %766 = vmatpush1.bf16.msra.mxu0 0
    %767 = vmatprep.subr.bf16.mxu0 0
    %768 = vmatpush1.bf16.msra.mxu0 0
    %769 = vmatprep.subr.bf16.mxu0 0
    %770 = vmatpush1.bf16.msra.mxu0 0
    %771 = vmatprep.subr.bf16.mxu0 0
    %772 = vmatpush1.bf16.msra.mxu0 0
    %773 = vmatprep.subr.bf16.mxu0 0
    %774 = vmatpush1.bf16.msra.mxu0 0
    %775 = vmatprep.subr.bf16.mxu0 0
    %776 = vmatpush1.bf16.msra.mxu0 0
    %777 = vmatprep.subr.bf16.mxu0 0
    %778 = vmatpush1.bf16.msra.mxu0 %v586
    %779 = vmatprep.subr.bf16.mxu0 0
    %780 = vmatpush2.bf16.msra.mxu0 0
    %781 = vmatprep.subr.bf16.mxu0 0
    %782 = vmatpush2.bf16.msra.mxu0 0
    %783 = vmatprep.subr.bf16.mxu0 0
    %784 = vmatpush2.bf16.msra.mxu0 0
    %785 = vmatprep.subr.bf16.mxu0 0
    %786 = vmatpush2.bf16.msra.mxu0 0
    %787 = vmatprep.subr.bf16.mxu0 0
    %788 = vmatpush2.bf16.msra.mxu0 0
    %789 = vmatprep.subr.bf16.mxu0 0
    %790 = vmatpush2.bf16.msra.mxu0 0
    %791 = vmatprep.subr.bf16.mxu0 0
    %792 = vmatpush2.bf16.msra.mxu0 0
    %793 = vmatprep.subr.bf16.mxu0 0
    %794 = vmatpush2.bf16.msra.mxu0 0
    %795 = vmatprep.mubr.bf16.mxu0 0
    %796 = vmatmul.mubr.bf16.gmra.mxu0 %v638
    %v797 = vpop.f32.mrf.mxu0
    %v798 = vadd.f32 %v757, %v797
    %v799 = vpop.f32.mrf.mxu0
    %v800 = vpop.f32.mrf.mxu0
    %v801 = vadd.f32 %v760, %v800
    %v802 = vpop.f32.mrf.mxu0
    %803 = vdwg.mxu0
    %v804 = vmax.f32 %v798, 0.0
    %v805 = vmax.f32 %v801, 0.0
    %v806 = vpack.c.bf16 %v805, %v804
    %v807 = vld [vmem:[%s3] sm:$0xf]
    %v808 = vld [vmem:[%s3 + $0x4] sm:$0xf]
    %v809 = vld [vmem:[%s3 + $0x8] sm:$0xf]
    %v810 = vld [vmem:[%s3 + $0xc] sm:$0xf]
    %v811 = vld [vmem:[%s3 + $0x10] sm:$0xf]
    %v812 = vld [vmem:[%s3 + $0x14] sm:$0xf]
    %v813 = vld [vmem:[%s3 + $0x18] sm:$0xf]
    %v814 = vld [vmem:[%s3 + $0x1c] sm:$0xf]
    %v815 = vld [vmem:[%s3 + $0x20] sm:$0xf]
    %v816 = vld [vmem:[%s3 + $0x24] sm:$0xf]
    %v817 = vld [vmem:[%s3 + $0x28] sm:$0xf]
    %v818 = vld [vmem:[%s3 + $0x2c] sm:$0xf]
    %v819 = vld [vmem:[%s3 + $0x30] sm:$0xf]
    %v820 = vld [vmem:[%s3 + $0x34] sm:$0xf]
    %v821 = vld [vmem:[%s3 + $0x38] sm:$0xf]
    %v822 = vld [vmem:[%s3 + $0x3c] sm:$0xf]
    %v823 = vld [vmem:[%s4] sm:$0x1]
    %v825 = vlaneseq
    %v826 = vshrl.u32 %v825, 7
    %v827 = vsub.s32 0, %v826
    %v828 = vrot.slane %v823, %v827
    %v846 = vunpack.c.l.b16 %v807
    %v847 = vunpack.c.l.b16 %v808
    %v848 = vunpack.c.l.b16 %v809
    %v849 = vunpack.c.l.b16 %v810
    %v850 = vunpack.c.l.b16 %v811
    %v851 = vunpack.c.l.b16 %v812
    %v852 = vunpack.c.l.b16 %v813
    %v853 = vunpack.c.l.b16 %v814
    %v854 = vunpack.c.l.b16 %v815
    %v855 = vunpack.c.l.b16 %v816
    %v856 = vunpack.c.l.b16 %v817
    %v857 = vunpack.c.l.b16 %v818
    %v858 = vunpack.c.l.b16 %v819
    %v859 = vunpack.c.l.b16 %v820
    %v860 = vunpack.c.l.b16 %v821
    %v861 = vunpack.c.l.b16 %v822
    %v862 = vpack.c.b16 %v847, %v846
    %v863 = vpack.c.b16 %v849, %v848
    %v864 = vpack.c.b16 %v851, %v850
    %v865 = vpack.c.b16 %v853, %v852
    %v866 = vpack.c.b16 %v855, %v854
    %v867 = vpack.c.b16 %v857, %v856
    %v868 = vpack.c.b16 %v859, %v858
    %v869 = vpack.c.b16 %v861, %v860
    %878 = vmatprep.subr.bf16.mxu0 0
    %879 = vmatpush1.bf16.msra.mxu0 %v869
    %880 = vmatprep.subr.bf16.mxu0 0
    %881 = vmatpush1.bf16.msra.mxu0 %v868
    %882 = vmatprep.subr.bf16.mxu0 0
    %883 = vmatpush1.bf16.msra.mxu0 %v867
    %884 = vmatprep.subr.bf16.mxu0 0
    %885 = vmatpush1.bf16.msra.mxu0 %v866
    %886 = vmatprep.subr.bf16.mxu0 0
    %887 = vmatpush1.bf16.msra.mxu0 %v865
    %888 = vmatprep.subr.bf16.mxu0 0
    %889 = vmatpush1.bf16.msra.mxu0 %v864
    %890 = vmatprep.subr.bf16.mxu0 0
    %891 = vmatpush1.bf16.msra.mxu0 %v863
    %892 = vmatprep.subr.bf16.mxu0 0
    %893 = vmatpush1.bf16.msra.mxu0 %v862
    %894 = vmatprep.subr.bf16.mxu0 0
    %895 = vmatpush2.bf16.msra.mxu0 0
    %896 = vmatprep.subr.bf16.mxu0 0
    %897 = vmatpush2.bf16.msra.mxu0 0
    %898 = vmatprep.subr.bf16.mxu0 0
    %899 = vmatpush2.bf16.msra.mxu0 0
    %900 = vmatprep.subr.bf16.mxu0 0
    %901 = vmatpush2.bf16.msra.mxu0 0
    %902 = vmatprep.subr.bf16.mxu0 0
    %903 = vmatpush2.bf16.msra.mxu0 0
    %904 = vmatprep.subr.bf16.mxu0 0
    %905 = vmatpush2.bf16.msra.mxu0 0
    %906 = vmatprep.subr.bf16.mxu0 0
    %907 = vmatpush2.bf16.msra.mxu0 0
    %908 = vmatprep.subr.bf16.mxu0 0
    %909 = vmatpush2.bf16.msra.mxu0 0
    %910 = vmatprep.mubr.bf16.mxu0 0
    %911 = vmatmul.mubr.bf16.gmra.mxu0 %v806
    %v912 = vpop.f32.mrf.mxu0
    %v913 = vadd.f32 %v828, %v912
    %v914 = vpop.f32.mrf.mxu0
    %v915 = vpop.f32.mrf.mxu0
    %v916 = vadd.f32 %v828, %v915
    %v917 = vpop.f32.mrf.mxu0
    %918 = vdwg.mxu0
    %v919 = vmax.f32 %v913, 0.0
    %v920 = vmax.f32 %v916, 0.0
    %v921 = vpack.c.bf16 %v920, %v919
    %v922 = vld [vmem:[%s5] sm:$0xf]
    %v923 = vld [vmem:[%s5 + $0x4] sm:$0xf]
    %v924 = vld [vmem:[%s5 + $0x8] sm:$0xf]
    %v925 = vld [vmem:[%s5 + $0xc] sm:$0xf]
    %v926 = vld [vmem:[%s5 + $0x10] sm:$0xf]
    %v927 = vld [vmem:[%s5 + $0x14] sm:$0xf]
    %v928 = vld [vmem:[%s5 + $0x18] sm:$0xf]
    %v929 = vld [vmem:[%s5 + $0x1c] sm:$0xf]
    %v930 = vld [vmem:[%s6] sm:$0x1]
    %v932 = vlaneseq
    %v933 = vshrl.u32 %v932, 7
    %v934 = vsub.s32 0, %v933
    %v935 = vrot.slane %v930, %v934
    %v945 = vunpack.c.l.b16 %v922
    %v946 = vunpack.c.l.b16 %v923
    %v947 = vunpack.c.l.b16 %v924
    %v948 = vunpack.c.l.b16 %v925
    %v949 = vunpack.c.l.b16 %v926
    %v950 = vunpack.c.l.b16 %v927
    %v951 = vunpack.c.l.b16 %v928
    %v952 = vunpack.c.l.b16 %v929
    %v953 = vpack.c.b16 %v946, %v945
    %v954 = vpack.c.b16 %v948, %v947
    %v955 = vpack.c.b16 %v950, %v949
    %v956 = vpack.c.b16 %v952, %v951
    %vm961 = vcmask 523264
    %v963 = vsel %vm961, %v921, 0
    %965 = vmatprep.subr.bf16.mxu0 0
    %966 = vmatpush1.bf16.msra.mxu0 0
    %967 = vmatprep.subr.bf16.mxu0 0
    %968 = vmatpush1.bf16.msra.mxu0 0
    %969 = vmatprep.subr.bf16.mxu0 0
    %970 = vmatpush1.bf16.msra.mxu0 0
    %971 = vmatprep.subr.bf16.mxu0 0
    %972 = vmatpush1.bf16.msra.mxu0 0
    %973 = vmatprep.subr.bf16.mxu0 0
    %974 = vmatpush1.bf16.msra.mxu0 %v956
    %975 = vmatprep.subr.bf16.mxu0 0
    %976 = vmatpush1.bf16.msra.mxu0 %v955
    %977 = vmatprep.subr.bf16.mxu0 0
    %978 = vmatpush1.bf16.msra.mxu0 %v954
    %979 = vmatprep.subr.bf16.mxu0 0
    %980 = vmatpush1.bf16.msra.mxu0 %v953
    %981 = vmatprep.subr.bf16.mxu0 0
    %982 = vmatpush2.bf16.msra.mxu0 0
    %983 = vmatprep.subr.bf16.mxu0 0
    %984 = vmatpush2.bf16.msra.mxu0 0
    %985 = vmatprep.subr.bf16.mxu0 0
    %986 = vmatpush2.bf16.msra.mxu0 0
    %987 = vmatprep.subr.bf16.mxu0 0
    %988 = vmatpush2.bf16.msra.mxu0 0
    %989 = vmatprep.subr.bf16.mxu0 0
    %990 = vmatpush2.bf16.msra.mxu0 0
    %991 = vmatprep.subr.bf16.mxu0 0
    %992 = vmatpush2.bf16.msra.mxu0 0
    %993 = vmatprep.subr.bf16.mxu0 0
    %994 = vmatpush2.bf16.msra.mxu0 0
    %995 = vmatprep.subr.bf16.mxu0 0
    %996 = vmatpush2.bf16.msra.mxu0 0
    %997 = vmatprep.mubr.bf16.mxu0 0
    %998 = vmatmul.mubr.bf16.gmra.mxu0 %v963
    %v999 = vpop.f32.mrf.mxu0
    %v1000 = vadd.f32 %v935, %v999
    %v1001 = vpop.f32.mrf.mxu0
    %v1002 = vpop.f32.mrf.mxu0
    %v1003 = vadd.f32 %v935, %v1002
    %v1004 = vpop.f32.mrf.mxu0
    %1005 = vdwg.mxu0
    %v1006 = vpack.c.bf16 %v1003, %v1000
    %v1008 = vcombine.high %v1006, %v1006
    %v1010 = vunpack.c.l.s4 1966171168
    %v1011 = vunpack.c.0.s8 %v1010
    %v1012 = vlaneseq
    %v1013 = vshrl.u32 %v1012, 7
    %v1014 = vsub.s32 %v1011, %v1013
    %v1015 = vrot.slane %v1006, %v1014
    %v1017 = vunpack.c.l.s4 1966171168
    %v1018 = vunpack.c.0.s8 %v1017
    %v1019 = vlaneseq
    %v1020 = vshrl.u32 %v1019, 7
    %v1021 = vsub.s32 %v1018, %v1020
    %v1022 = vrot.slane %v1008, %v1021
    %v1023 = vcombine.high %v1015, %v1015
    %v1024 = vcombine.high %v1022, %v1022
    %v1026 = vunpack.c.l.s4 1966171168
    %v1027 = vunpack.c.0.s8 %v1026
    %v1028 = vlaneseq
    %v1029 = vshrl.u32 %v1028, 7
    %v1030 = vsub.s32 %v1027, %v1029
    %v1031 = vrot.slane %v1015, %v1030
    %v1033 = vunpack.c.l.s4 1966171168
    %v1034 = vunpack.c.0.s8 %v1033
    %v1035 = vlaneseq
    %v1036 = vshrl.u32 %v1035, 7
    %v1037 = vsub.s32 %v1034, %v1036
    %v1038 = vrot.slane %v1022, %v1037
    %v1040 = vunpack.c.l.s4 1966171168
    %v1041 = vunpack.c.0.s8 %v1040
    %v1042 = vlaneseq
    %v1043 = vshrl.u32 %v1042, 7
    %v1044 = vsub.s32 %v1041, %v1043
    %v1045 = vrot.slane %v1023, %v1044
    %v1047 = vunpack.c.l.s4 1966171168
    %v1048 = vunpack.c.0.s8 %v1047
    %v1049 = vlaneseq
    %v1050 = vshrl.u32 %v1049, 7
    %v1051 = vsub.s32 %v1048, %v1050
    %v1052 = vrot.slane %v1024, %v1051
    %v1053 = vcombine.high %v1031, %v1031
    %v1054 = vcombine.high %v1038, %v1038
    %v1055 = vcombine.high %v1045, %v1045
    %v1056 = vcombine.high %v1052, %v1052
    %1065 = vst [vmem:[#allocation5] sm:$0x1] %v1031
    %1066 = vst [vmem:[#allocation5 + $0x1] sm:$0x1] %v1045
    %1067 = vst [vmem:[#allocation5 + $0x2] sm:$0x1] %v1053
    %1068 = vst [vmem:[#allocation5 + $0x3] sm:$0x1] %v1055
    %1069 = vst [vmem:[#allocation5 + $0x4] sm:$0x1] %v1038
    %1070 = vst [vmem:[#allocation5 + $0x5] sm:$0x1] %v1052
    %1071 = vst [vmem:[#allocation5 + $0x6] sm:$0x1] %v1054
    %1072 = vst [vmem:[#allocation5 + $0x7] sm:$0x1] %v1056
    // Predicated region
    $region34: #{tpu_custom_call.1} parent=1 // pred_check
      _
    $region35: #{tpu_custom_call.1} parent=1 // pred_check_branch
      %1074 = sbr.rel (0) target = $region37
    $region36: #{tpu_custom_call.1} parent=1 // pred_region
      %s1076 = ssub.s32 128, 16
      %1077 = vsyncadd [#allocation4], %s1076
      %s1078 = sshll.u32 [#allocation5], 4
      %s1079 = int_to_ptr.vmem [resolvable:$true] %s1078
      %1084 = dma.vmem_to_hbm [thread:$0]  %s1079, 16, %s7, [#allocation4], 16, 16, 1
    $region37: #{tpu_custom_call.1} parent=1 // pred_fallthru
      _
    // Predicated region
    $region38: #{tpu_custom_call.1} parent=1 // pred_check
      _
    $region39: #{tpu_custom_call.1} parent=1 // pred_check_branch
      %1086 = sbr.rel (0) target = $region41
    $region40: #{tpu_custom_call.1} parent=1 // pred_region
      %1087 = dma.done [#allocation4], 128
    $region41: #{tpu_custom_call.1} parent=1 // pred_fallthru
      _
    %1088 = vsyncpa [#allocation3], 1
    %1089 = vsyncpa [#allocation4], 1

</llo_original>
